<compile_context>
chip_gen: v5e
topology: v5e:2x2
jax: 0.10.0
libtpu: 0.0.40
codegen_flags: <defaults>
</compile_context>

<pallas_src>
import functools

import jax
import jax.numpy as jnp
from jax import lax
from jax.experimental import pallas as pl
from jax.experimental.pallas import tpu as pltpu

_BN_EPS = 1e-5  # PyTorch BatchNorm1d default eps


def _vmem_capacity_bytes():
    try:
        return int(pltpu.get_tpu_info().vmem_capacity_bytes)
    except Exception:
        return 64 * 1024 * 1024  # conservative fallback (v7x per-TC VMEM)


def _vmem_estimate(b, d, tile, mm_itemsize):
    """Rough VMEM footprint of the kernel for a given feature tile."""
    n_tiles = max(1, d // tile)
    z1_in = 2 * b * tile * 4                 # streamed z1 tile, double-buffered (f32)
    z2_in = 2 * b * d * 4                    # resident z2 sub-batch, double-buffered (f32)
    z1n = b * tile * mm_itemsize             # normalized z1 tile scratch
    z2n = n_tiles * b * tile * mm_itemsize   # normalized z2 scratch (full width)
    accs = 2 * tile * 4 + 2 * 8 * 128 * 4    # lane-dense accumulators + out buffers
    cc_tmp = 3 * tile * tile * 4             # cc tile + elementwise temp + headroom
    bn_tmp = 3 * b * tile * 4                # BN temporaries
    return z1_in + z2_in + z1n + z2n + accs + cc_tmp + bn_tmp


def _pick_tile(b, d, mm_itemsize, vmem_budget, max_tile=None):
    """Largest multiple-of-128 feature tile dividing d that fits the budget."""
    if d % 128 != 0:
        # TODO(synk): mask/pad path for z_dim not a multiple of 128 that is
        # also too large for a single full-width tile.
        return d
    hard_cap = 2048
    cap = min(d, hard_cap if max_tile is None
              else max(128, (max_tile // 128) * 128))
    best, t = 128, 128
    while t <= cap:
        if d % t == 0 and _vmem_estimate(b, d, t, mm_itemsize) <= vmem_budget:
            best = t
        t += 128
    return best


def _bt_loss_kernel(z1_ref, z2_ref, out_ref,
                    z1n_ref, z2n_ref, acc_off_ref, acc_diag_ref,
                    *, inv_eff_bs, lam, corr_neg_one, n_tiles, tile,
                    matmul_dtype):
    j = pl.program_id(1)   # z1 (row) feature tile
    k = pl.program_id(2)   # z2 (col) feature tile

    def _bn(x):
        # nn.BatchNorm1d(affine=False), training mode: per-feature batch stats
        # (biased variance).  rsqrt lowers to the EUP slot.
        mean = jnp.mean(x, axis=0, keepdims=True)
        cen = x - mean
        var = jnp.mean(cen * cen, axis=0, keepdims=True)
        return cen * lax.rsqrt(var + _BN_EPS)

    # ---- once per sub-batch: reset accumulators, normalize all of z2 ----
    @pl.when((j == 0) & (k == 0))
    def _start_sub_batch():
        acc_off_ref[...] = jnp.zeros_like(acc_off_ref)
        acc_diag_ref[...] = jnp.zeros_like(acc_diag_ref)
        # Normalize z2 feature-tile by feature-tile (static slices, unrolled)
        # so BN temporaries stay (B, tile) rather than (B, D).
        for t in range(n_tiles):
            z2t = z2_ref[0, :, t * tile:(t + 1) * tile]        # (B, tile) f32
            z2n_ref[t] = _bn(z2t).astype(matmul_dtype)

    # ---- once per (sub-batch, row tile): normalize z1 tile j ----
    @pl.when(k == 0)
    def _start_row_tile():
        # Fold 1/effective_batch_size into the normalized LHS (O(B*tile)).
        z1n_ref[...] = (_bn(z1_ref[0]) * inv_eff_bs).astype(matmul_dtype)

    # ---- every step: one (tile x tile) cross-correlation block ----
    a = z1n_ref[...]            # (B, tile) matmul_dtype
    bmat = z2n_ref[k]           # (B, tile) matmul_dtype
    # cc = z1n^T @ z2n, contracting the batch axis of both operands.
    # TODO(synk): verify via bundle dump that this orientation avoids an XLU
    # transpose; sums are transpose-invariant so operands could be swapped.
    cc = lax.dot_general(a, bmat,
                         dimension_numbers=(((0,), (0,)), ((), ())),
                         preferred_element_type=jnp.float32)   # (tile, tile)
    if corr_neg_one:
        f = (cc + 1.0) * (cc + 1.0)
    else:
        f = cc * cc
    # Lane-dense partial sum; cross-lane reduce & lambda deferred to finalize.
    acc_off_ref[...] += jnp.sum(f, axis=0, keepdims=True)

    # Diagonal elements only live in tiles with j == k.  Recompute them from
    # the SAME matmul-dtype operands (upcast to f32) so the off-diagonal
    # correction cancels the MXU diagonal exactly.
    @pl.when(j == k)
    def _diag():
        z1f = a.astype(jnp.float32)
        z2f = bmat.astype(jnp.float32)
        diag = jnp.sum(z1f * z2f, axis=0, keepdims=True)       # (1, tile)
        on = (diag - 1.0) * (diag - 1.0)
        if corr_neg_one:
            doff = (diag + 1.0) * (diag + 1.0)
        else:
            doff = diag * diag
        acc_diag_ref[...] += on - lam * doff

    # ---- once per sub-batch: reduce and emit a lane-dense per-i partial ----
    @pl.when((j == n_tiles - 1) & (k == n_tiles - 1))
    def _finalize():
        loss_i = lam * jnp.sum(acc_off_ref[...]) + jnp.sum(acc_diag_ref[...])
        out_ref[...] = jnp.broadcast_to(loss_i, out_ref.shape).astype(jnp.float32)


def barlow_twins_loss(z1, z2, *, effective_batch_size=None,
                      corr_neg_one=False, max_tile=None,
                      matmul_dtype=jnp.bfloat16):
    """Pallas implementation of BarlowTwinsLoss.forward.

    z1, z2: (num_batches, B, z_dim) arrays.  Returns {'value': scalar loss}.
    """
    num_batches, b, d = z1.shape
    assert z2.shape == z1.shape
    eff_bs = float(effective_batch_size) if effective_batch_size is not None \
        else float(b)
    lam = 1.0 / d
    mm_itemsize = jnp.dtype(matmul_dtype).itemsize

    capacity = _vmem_capacity_bytes()
    budget = int(0.65 * capacity)
    tile = _pick_tile(b, d, mm_itemsize, budget, max_tile=max_tile)
    n_tiles = max(1, d // tile)
    assert n_tiles * tile == d
    grid = (num_batches, n_tiles, n_tiles)

    kernel = functools.partial(
        _bt_loss_kernel,
        inv_eff_bs=1.0 / eff_bs, lam=lam, corr_neg_one=corr_neg_one,
        n_tiles=n_tiles, tile=tile, matmul_dtype=matmul_dtype)

    est = _vmem_estimate(b, d, tile, mm_itemsize)
    vmem_limit = max(32 * 1024 * 1024,
                     min(int(0.75 * capacity), int(1.35 * est)))
    # TODO(synk): if a single (B, z_dim) f32 sub-batch overflows VMEM, the
    # resident-z2 layout no longer fits; a streamed fallback is not provided.

    itemsize = jnp.dtype(z1.dtype).itemsize
    cost = pl.CostEstimate(
        flops=num_batches * 2 * b * d * d,
        transcendentals=num_batches * 2 * d,           # one rsqrt per feature/input
        bytes_accessed=num_batches * 2 * b * d * itemsize
        + num_batches * 8 * 128 * 4)

    out = pl.pallas_call(
        kernel,
        out_shape=jax.ShapeDtypeStruct((num_batches, 8, 128), jnp.float32),
        grid=grid,
        in_specs=[
            # z1: streamed one feature tile per row-tile j (each tile read once).
            pl.BlockSpec((1, b, tile), lambda i, j, k: (i, 0, j)),
            # z2: full sub-batch resident across the whole (j, k) loop.
            pl.BlockSpec((1, b, d), lambda i, j, k: (i, 0, 0)),
        ],
        out_specs=pl.BlockSpec((1, 8, 128), lambda i, j, k: (i, 0, 0)),
        scratch_shapes=[
            pltpu.VMEM((b, tile), matmul_dtype),             # z1n tile
            pltpu.VMEM((n_tiles, b, tile), matmul_dtype),    # z2n (full width)
            pltpu.VMEM((1, tile), jnp.float32),              # off-diag partial
            pltpu.VMEM((1, tile), jnp.float32),              # diag partial
        ],
        compiler_params=pltpu.CompilerParams(
            dimension_semantics=("parallel", "arbitrary", "arbitrary"),
            vmem_limit_bytes=vmem_limit),
        cost_estimate=cost,
    )(z1, z2)

    loss = jnp.sum(out[:, 0, 0]) / jnp.float32(num_batches)
    return {"value": loss}


def _reference_loss(z1, z2, *, effective_batch_size=None, corr_neg_one=False):
    """Pure-JAX f32 reference matching the PyTorch module (training-mode BN)."""
    num_batches, b, d = z1.shape
    eff_bs = effective_batch_size if effective_batch_size is not None else b
    lam = 1.0 / d

    def bn(x):
        mean = jnp.mean(x, axis=0, keepdims=True)
        var = jnp.mean((x - mean) ** 2, axis=0, keepdims=True)
        return (x - mean) / jnp.sqrt(var + _BN_EPS)

    loss = 0.0
    for i in range(num_batches):
        cc = bn(z1[i]).T @ bn(z2[i]) / eff_bs
        on_diag = jnp.sum((jnp.diag(cc) - 1.0) ** 2)
        mask = ~jnp.eye(d, dtype=bool)
        if corr_neg_one:
            off_diag = jnp.sum(jnp.where(mask, (cc + 1.0) ** 2, 0.0))
        else:
            off_diag = jnp.sum(jnp.where(mask, cc ** 2, 0.0))
        loss = loss + on_diag + lam * off_diag
    return loss / num_batches


if __name__ == "__main__":
    key = jax.random.PRNGKey(0)
    k1, k2, k3, k4 = jax.random.split(key, 4)

    # (8,128)-aligned small shapes: B multiple of 8, z_dim multiple of 128.
    nb, batch, z_dim = 2, 8, 128
    z1 = jax.random.normal(k1, (nb, batch, z_dim), dtype=jnp.float32)
    z2 = jax.random.normal(k2, (nb, batch, z_dim), dtype=jnp.float32)

    out = barlow_twins_loss(z1, z2, corr_neg_one=False)
    val = jax.block_until_ready(out["value"])
    ref = _reference_loss(z1, z2, corr_neg_one=False)
    assert jnp.allclose(val, ref, rtol=2e-2, atol=2e-2), (val, ref)

    out_neg = barlow_twins_loss(z1, z2, corr_neg_one=True)
    val_neg = jax.block_until_ready(out_neg["value"])
    ref_neg = _reference_loss(z1, z2, corr_neg_one=True)
    assert jnp.allclose(val_neg, ref_neg, rtol=2e-2, atol=2e-2), (val_neg, ref_neg)

    # Multi-tile path (grid 2x2x2 via max_tile=128) + strict f32 MXU path.
    nb2, batch2, z_dim2 = 2, 8, 256
    w1 = jax.random.normal(k3, (nb2, batch2, z_dim2), dtype=jnp.float32)
    w2 = jax.random.normal(k4, (nb2, batch2, z_dim2), dtype=jnp.float32)

    out_t = barlow_twins_loss(w1, w2, max_tile=128)
    val_t = jax.block_until_ready(out_t["value"])
    ref_t = _reference_loss(w1, w2)
    assert jnp.allclose(val_t, ref_t, rtol=2e-2, atol=2e-2), (val_t, ref_t)

    out_f32 = barlow_twins_loss(w1, w2, max_tile=128, matmul_dtype=jnp.float32)
    val_f32 = jax.block_until_ready(out_f32["value"])
    assert jnp.allclose(val_f32, ref_t, rtol=1e-3, atol=1e-3), (val_f32, ref_t)

    print("KERNEL_OK")
</pallas_src>

<mosaic_0001>
module attributes {stable_mosaic.version = 11 : i64} {
  func.func @_bt_loss_kernel(%arg0: i32, %arg1: i32, %arg2: i32, %arg3: memref<1x8x128xf32, #tpu.memory_space<vmem>>, %arg4: memref<1x8x128xf32, #tpu.memory_space<vmem>>, %arg5: memref<1x8x128xf32, #tpu.memory_space<vmem>>, %arg6: memref<8x128xbf16, #tpu.memory_space<vmem>>, %arg7: memref<1x8x128xbf16, #tpu.memory_space<vmem>>, %arg8: memref<1x128xf32, #tpu.memory_space<vmem>>, %arg9: memref<1x128xf32, #tpu.memory_space<vmem>>) attributes {dimension_semantics = [#tpu.dimension_semantics<parallel>, #tpu.dimension_semantics<arbitrary>, #tpu.dimension_semantics<arbitrary>], iteration_bounds = array<i64: 2, 1, 1>, scalar_prefetch = 0 : i64, scratch_operands = 4 : i64, tpu.core_type = #tpu.core_type<tc>, window_params = [{transform_indices = @transform_0, window_bounds = array<i64: 1, 8, 128>}, {transform_indices = @transform_1, window_bounds = array<i64: 1, 8, 128>}, {transform_indices = @transform_2, window_bounds = array<i64: 1, 8, 128>}]} {
    %c0_i32 = arith.constant 0 : i32
    %0 = arith.cmpi eq, %arg1, %c0_i32 : i32
    %c0_i32_0 = arith.constant 0 : i32
    %1 = arith.cmpi eq, %arg2, %c0_i32_0 : i32
    %2 = arith.andi %0, %1 : i1
    %3 = arith.extui %2 : i1 to i32
    %c0_i32_1 = arith.constant 0 : i32
    %4 = arith.cmpi ne, %3, %c0_i32_1 : i32
    scf.if %4 {
      %cst_16 = arith.constant 0.000000e+00 : f32
      %27 = vector.broadcast %cst_16 : f32 to vector<1x128xf32>
      %c0_17 = arith.constant 0 : index
      %c0_18 = arith.constant 0 : index
      %28 = vector.load %arg8[%c0_17, %c0_18] : memref<1x128xf32, #tpu.memory_space<vmem>>, vector<1x128xf32>
      tpu.vector_store %arg8[%c0_17, %c0_18], %27 {strides = array<i32>} : memref<1x128xf32, #tpu.memory_space<vmem>>, vector<1x128xf32>,
      %cst_19 = arith.constant 0.000000e+00 : f32
      %29 = vector.broadcast %cst_19 : f32 to vector<1x128xf32>
      %c0_20 = arith.constant 0 : index
      %c0_21 = arith.constant 0 : index
      %30 = vector.load %arg9[%c0_20, %c0_21] : memref<1x128xf32, #tpu.memory_space<vmem>>, vector<1x128xf32>
      tpu.vector_store %arg9[%c0_20, %c0_21], %29 {strides = array<i32>} : memref<1x128xf32, #tpu.memory_space<vmem>>, vector<1x128xf32>,
      %c0_22 = arith.constant 0 : index
      %c0_23 = arith.constant 0 : index
      %c0_24 = arith.constant 0 : index
      %31 = vector.load %arg4[%c0_22, %c0_23, %c0_24] : memref<1x8x128xf32, #tpu.memory_space<vmem>>, vector<1x8x128xf32>
      %32 = vector.shape_cast %31 : vector<1x8x128xf32> to vector<8x128xf32>
      %cst_25 = arith.constant dense<0.000000e+00> : vector<128xf32>
      %33 = vector.multi_reduction <add>, %32, %cst_25 [0] : vector<8x128xf32> to vector<128xf32>
      %34 = vector.shape_cast %33 : vector<128xf32> to vector<1x128xf32>
      %cst_26 = arith.constant 8.000000e+00 : f32
      %35 = vector.broadcast %cst_26 : f32 to vector<1x128xf32>
      %36 = arith.divf %34, %35 : vector<1x128xf32>
      %37 = vector.broadcast %36 : vector<1x128xf32> to vector<8x128xf32>
      %38 = arith.subf %32, %37 : vector<8x128xf32>
      %39 = arith.mulf %38, %38 : vector<8x128xf32>
      %cst_27 = arith.constant dense<0.000000e+00> : vector<128xf32>
      %40 = vector.multi_reduction <add>, %39, %cst_27 [0] : vector<8x128xf32> to vector<128xf32>
      %41 = vector.shape_cast %40 : vector<128xf32> to vector<1x128xf32>
      %cst_28 = arith.constant 8.000000e+00 : f32
      %42 = vector.broadcast %cst_28 : f32 to vector<1x128xf32>
      %43 = arith.divf %41, %42 : vector<1x128xf32>
      %cst_29 = arith.constant 9.99999974E-6 : f32
      %44 = vector.broadcast %cst_29 : f32 to vector<1x128xf32>
      %45 = arith.addf %43, %44 : vector<1x128xf32>
      %46 = math.rsqrt %45 : vector<1x128xf32>
      %47 = vector.broadcast %46 : vector<1x128xf32> to vector<8x128xf32>
      %48 = arith.mulf %38, %47 : vector<8x128xf32>
      %49 = arith.truncf %48 : vector<8x128xf32> to vector<8x128xbf16>
      %c0_30 = arith.constant 0 : index
      %c0_31 = arith.constant 0 : index
      %c0_32 = arith.constant 0 : index
      %50 = vector.load %arg7[%c0_30, %c0_31, %c0_32] : memref<1x8x128xbf16, #tpu.memory_space<vmem>>, vector<1x8x128xbf16>
      %51 = vector.shape_cast %50 : vector<1x8x128xbf16> to vector<8x128xbf16>
      %52 = vector.shape_cast %49 : vector<8x128xbf16> to vector<1x8x128xbf16>
      tpu.vector_store %arg7[%c0_30, %c0_31, %c0_32], %52 {strides = array<i32>} : memref<1x8x128xbf16, #tpu.memory_space<vmem>>, vector<1x8x128xbf16>,
    } else {
    }
    %c0_i32_2 = arith.constant 0 : i32
    %5 = arith.cmpi eq, %arg2, %c0_i32_2 : i32
    %6 = arith.extui %5 : i1 to i32
    %c0_i32_3 = arith.constant 0 : i32
    %7 = arith.cmpi ne, %6, %c0_i32_3 : i32
    scf.if %7 {
      %c0_16 = arith.constant 0 : index
      %c0_17 = arith.constant 0 : index
      %c0_18 = arith.constant 0 : index
      %27 = vector.load %arg3[%c0_16, %c0_17, %c0_18] : memref<1x8x128xf32, #tpu.memory_space<vmem>>, vector<1x8x128xf32>
      %28 = vector.shape_cast %27 : vector<1x8x128xf32> to vector<8x128xf32>
      %cst_19 = arith.constant dense<0.000000e+00> : vector<128xf32>
      %29 = vector.multi_reduction <add>, %28, %cst_19 [0] : vector<8x128xf32> to vector<128xf32>
      %30 = vector.shape_cast %29 : vector<128xf32> to vector<1x128xf32>
      %cst_20 = arith.constant 8.000000e+00 : f32
      %31 = vector.broadcast %cst_20 : f32 to vector<1x128xf32>
      %32 = arith.divf %30, %31 : vector<1x128xf32>
      %33 = vector.broadcast %32 : vector<1x128xf32> to vector<8x128xf32>
      %34 = arith.subf %28, %33 : vector<8x128xf32>
      %35 = arith.mulf %34, %34 : vector<8x128xf32>
      %cst_21 = arith.constant dense<0.000000e+00> : vector<128xf32>
      %36 = vector.multi_reduction <add>, %35, %cst_21 [0] : vector<8x128xf32> to vector<128xf32>
      %37 = vector.shape_cast %36 : vector<128xf32> to vector<1x128xf32>
      %cst_22 = arith.constant 8.000000e+00 : f32
      %38 = vector.broadcast %cst_22 : f32 to vector<1x128xf32>
      %39 = arith.divf %37, %38 : vector<1x128xf32>
      %cst_23 = arith.constant 9.99999974E-6 : f32
      %40 = vector.broadcast %cst_23 : f32 to vector<1x128xf32>
      %41 = arith.addf %39, %40 : vector<1x128xf32>
      %42 = math.rsqrt %41 : vector<1x128xf32>
      %43 = vector.broadcast %42 : vector<1x128xf32> to vector<8x128xf32>
      %44 = arith.mulf %34, %43 : vector<8x128xf32>
      %cst_24 = arith.constant 1.250000e-01 : f32
      %45 = vector.broadcast %cst_24 : f32 to vector<8x128xf32>
      %46 = arith.mulf %44, %45 : vector<8x128xf32>
      %47 = arith.truncf %46 : vector<8x128xf32> to vector<8x128xbf16>
      %c0_25 = arith.constant 0 : index
      %c0_26 = arith.constant 0 : index
      %48 = vector.load %arg6[%c0_25, %c0_26] : memref<8x128xbf16, #tpu.memory_space<vmem>>, vector<8x128xbf16>
      tpu.vector_store %arg6[%c0_25, %c0_26], %47 {strides = array<i32>} : memref<8x128xbf16, #tpu.memory_space<vmem>>, vector<8x128xbf16>,
    } else {
    }
    %c0 = arith.constant 0 : index
    %c0_4 = arith.constant 0 : index
    %8 = vector.load %arg6[%c0, %c0_4] : memref<8x128xbf16, #tpu.memory_space<vmem>>, vector<8x128xbf16>
    %9 = arith.index_cast %arg2 : i32 to index
    %c0_5 = arith.constant 0 : index
    %c0_6 = arith.constant 0 : index
    %10 = vector.load %arg7[%9, %c0_5, %c0_6] : memref<1x8x128xbf16, #tpu.memory_space<vmem>>, vector<1x8x128xbf16>
    %11 = vector.shape_cast %10 : vector<1x8x128xbf16> to vector<8x128xbf16>
    %cst = arith.constant dense<0.000000e+00> : vector<128x128xf32>
    %12 = tpu.matmul %8, %11, %cst {dimension_numbers = #tpu.dot_dimension_numbers<[0], [0], [1], [1], [0, 1, 1, 1], [], []>} : vector<8x128xbf16>, vector<8x128xbf16>, vector<128x128xf32> -> vector<128x128xf32>
    %13 = arith.mulf %12, %12 : vector<128x128xf32>
    %c0_7 = arith.constant 0 : index
    %c0_8 = arith.constant 0 : index
    %14 = vector.load %arg8[%c0_7, %c0_8] : memref<1x128xf32, #tpu.memory_space<vmem>>, vector<1x128xf32>
    %cst_9 = arith.constant dense<0.000000e+00> : vector<128xf32>
    %15 = vector.multi_reduction <add>, %13, %cst_9 [0] : vector<128x128xf32> to vector<128xf32>
    %16 = vector.shape_cast %15 : vector<128xf32> to vector<1x128xf32>
    %17 = arith.addf %14, %16 : vector<1x128xf32>
    %c0_10 = arith.constant 0 : index
    %c0_11 = arith.constant 0 : index
    %18 = vector.load %arg8[%c0_10, %c0_11] : memref<1x128xf32, #tpu.memory_space<vmem>>, vector<1x128xf32>
    tpu.vector_store %arg8[%c0_10, %c0_11], %17 {strides = array<i32>} : memref<1x128xf32, #tpu.memory_space<vmem>>, vector<1x128xf32>,
    %19 = arith.cmpi eq, %arg1, %arg2 : i32
    %20 = arith.extui %19 : i1 to i32
    %c0_i32_12 = arith.constant 0 : i32
    %21 = arith.cmpi ne, %20, %c0_i32_12 : i32
    scf.if %21 {
      %27 = arith.extf %8 : vector<8x128xbf16> to vector<8x128xf32>
      %28 = arith.extf %11 : vector<8x128xbf16> to vector<8x128xf32>
      %29 = arith.mulf %27, %28 : vector<8x128xf32>
      %cst_16 = arith.constant dense<0.000000e+00> : vector<128xf32>
      %30 = vector.multi_reduction <add>, %29, %cst_16 [0] : vector<8x128xf32> to vector<128xf32>
      %31 = vector.shape_cast %30 : vector<128xf32> to vector<1x128xf32>
      %cst_17 = arith.constant 1.000000e+00 : f32
      %32 = vector.broadcast %cst_17 : f32 to vector<1x128xf32>
      %33 = arith.subf %31, %32 : vector<1x128xf32>
      %cst_18 = arith.constant 1.000000e+00 : f32
      %34 = vector.broadcast %cst_18 : f32 to vector<1x128xf32>
      %35 = arith.subf %31, %34 : vector<1x128xf32>
      %36 = arith.mulf %33, %35 : vector<1x128xf32>
      %37 = arith.mulf %31, %31 : vector<1x128xf32>
      %c0_19 = arith.constant 0 : index
      %c0_20 = arith.constant 0 : index
      %38 = vector.load %arg9[%c0_19, %c0_20] : memref<1x128xf32, #tpu.memory_space<vmem>>, vector<1x128xf32>
      %cst_21 = arith.constant 7.812500e-03 : f32
      %39 = vector.broadcast %cst_21 : f32 to vector<1x128xf32>
      %40 = arith.mulf %39, %37 : vector<1x128xf32>
      %41 = arith.subf %36, %40 : vector<1x128xf32>
      %42 = arith.addf %38, %41 : vector<1x128xf32>
      %c0_22 = arith.constant 0 : index
      %c0_23 = arith.constant 0 : index
      %43 = vector.load %arg9[%c0_22, %c0_23] : memref<1x128xf32, #tpu.memory_space<vmem>>, vector<1x128xf32>
      tpu.vector_store %arg9[%c0_22, %c0_23], %42 {strides = array<i32>} : memref<1x128xf32, #tpu.memory_space<vmem>>, vector<1x128xf32>,
    } else {
    }
    %c0_i32_13 = arith.constant 0 : i32
    %22 = arith.cmpi eq, %arg1, %c0_i32_13 : i32
    %c0_i32_14 = arith.constant 0 : i32
    %23 = arith.cmpi eq, %arg2, %c0_i32_14 : i32
    %24 = arith.andi %22, %23 : i1
    %25 = arith.extui %24 : i1 to i32
    %c0_i32_15 = arith.constant 0 : i32
    %26 = arith.cmpi ne, %25, %c0_i32_15 : i32
    scf.if %26 {
      %c0_16 = arith.constant 0 : index
      %c0_17 = arith.constant 0 : index
      %27 = vector.load %arg8[%c0_16, %c0_17] : memref<1x128xf32, #tpu.memory_space<vmem>>, vector<1x128xf32>
      %28 = vector.shape_cast %27 : vector<1x128xf32> to vector<1x1x128xf32>
      %cst_18 = arith.constant dense<0.000000e+00> : vector<1xf32>
      %29 = vector.multi_reduction <add>, %28, %cst_18 [1, 2] : vector<1x1x128xf32> to vector<1xf32>
      %30 = vector.shape_cast %29 : vector<1xf32> to vector<1x1x1xf32>
      %31 = vector.extract %30[0, 0, 0] : f32 from vector<1x1x1xf32>
      %cst_19 = arith.constant 7.812500e-03 : f32
      %32 = arith.mulf %cst_19, %31 : f32
      %c0_20 = arith.constant 0 : index
      %c0_21 = arith.constant 0 : index
      %33 = vector.load %arg9[%c0_20, %c0_21] : memref<1x128xf32, #tpu.memory_space<vmem>>, vector<1x128xf32>
      %34 = vector.shape_cast %33 : vector<1x128xf32> to vector<1x1x128xf32>
      %cst_22 = arith.constant dense<0.000000e+00> : vector<1xf32>
      %35 = vector.multi_reduction <add>, %34, %cst_22 [1, 2] : vector<1x1x128xf32> to vector<1xf32>
      %36 = vector.shape_cast %35 : vector<1xf32> to vector<1x1x1xf32>
      %37 = vector.extract %36[0, 0, 0] : f32 from vector<1x1x1xf32>
      %38 = arith.addf %32, %37 : f32
      %39 = vector.broadcast %38 : f32 to vector<1x8x128xf32>
      %c0_23 = arith.constant 0 : index
      %c0_24 = arith.constant 0 : index
      %c0_25 = arith.constant 0 : index
      %40 = vector.load %arg5[%c0_23, %c0_24, %c0_25] : memref<1x8x128xf32, #tpu.memory_space<vmem>>, vector<1x8x128xf32>
      tpu.vector_store %arg5[%c0_23, %c0_24, %c0_25], %39 {strides = array<i32>} : memref<1x8x128xf32, #tpu.memory_space<vmem>>, vector<1x8x128xf32>,
    } else {
    }
    return
  }
  func.func @transform_0(%arg0: i32, %arg1: i32, %arg2: i32) -> (i32, i32, i32) {
    %c0_i32 = arith.constant 0 : i32
    %c0_i32_0 = arith.constant 0 : i32
    return %arg0, %c0_i32, %arg1 : i32, i32, i32
  }
  func.func @transform_1(%arg0: i32, %arg1: i32, %arg2: i32) -> (i32, i32, i32) {
    %c0_i32 = arith.constant 0 : i32
    %c0_i32_0 = arith.constant 0 : i32
    %c0_i32_1 = arith.constant 0 : i32
    return %arg0, %c0_i32, %c0_i32_0 : i32, i32, i32
  }
  func.func @transform_2(%arg0: i32, %arg1: i32, %arg2: i32) -> (i32, i32, i32) {
    %c0_i32 = arith.constant 0 : i32
    %c0_i32_0 = arith.constant 0 : i32
    %c0_i32_1 = arith.constant 0 : i32
    return %arg0, %c0_i32, %c0_i32_0 : i32, i32, i32
  }
}

</mosaic_0001>

<llo_original>
// kernel: tpu_custom_call.1
$region0: #{tpu_custom_call.1}
  #allocation0 [shape = 'u32[]', space=smem, size = 0x4, offset = 0x4, fixed_abs, tag = 'smem constant byte address 0x4 - core index']
  #allocation1 [shape = 'u32[72,128]{1,0:T(1,128)}', space=vmem, size = 0x9000, scoped, tag = 'internal scratch']
  #allocation2 [shape = 'bf16[8,128]{1,0:T(8,128)(2,1)}', space=vmem, size = 0x800, scoped, tag = 'scratch operand']
  #allocation3 [shape = 'bf16[1,8,128]{2,1,0:T(8,128)(2,1)}', space=vmem, size = 0x800, scoped, tag = 'scratch operand']
  #allocation4 [shape = 'f32[1,128]{1,0:T(1,128)}', space=vmem, size = 0x200, scoped, tag = 'scratch operand']
  #allocation5 [shape = 'f32[1,128]{1,0:T(1,128)}', space=vmem, size = 0x200, scoped, tag = 'scratch operand']
  %s0 = inlined_call_operand.hbm [shape: f32[2,8,128], index: 0, kind: input, shape index: {}]
  %s1 = inlined_call_operand.hbm [shape: f32[2,8,128], index: 1, kind: input, shape index: {}]
  %s2 = inlined_call_operand.hbm [shape: f32[2,8,128], index: 2, kind: output, shape index: {}]
  %s3 = sld [smem:[#allocation0]]
  $region65: #{tpu_custom_call.1} parent=0
    _
  %s5 = ssub.s32 1, %s3
  %s6 = scalar_select 0, %s5, %s3
  $region1: #{tpu_custom_call.1} parent=0
    #allocation6 [shape = 'u8[8192]{0}', space=vmem, size = 0x2000, scoped, tag = 'input window, operand 0']
    #allocation7 [shape = 's32[2]{0}', space=sflag, size = 0x8, scoped, tag = 'scoped memory for tpu_custom_call.1']
    #allocation8 [shape = 's32[2]{0}', space=sflag, size = 0x8, scoped, tag = 'scoped memory for tpu_custom_call.1']
    #allocation9 [shape = 'u8[8192]{0}', space=vmem, size = 0x2000, scoped, tag = 'input window, operand 1']
    #allocation10 [shape = 's32[2]{0}', space=sflag, size = 0x8, scoped, tag = 'scoped memory for tpu_custom_call.1']
    #allocation11 [shape = 'u8[8192]{0}', space=vmem, size = 0x2000, scoped, tag = 'output window, operand 0']
    %7 = vsyncpa [#allocation7], 0
    %s8 = scalar_lea.sflag [#allocation7], 1
    %9 = vsyncpa %s8, 0
    %10 = vsyncpa [#allocation10], 0
    %s11 = scalar_lea.sflag [#allocation10], 1
    %12 = vsyncpa %s11, 0
    %13 = vsyncpa [#allocation8], 0
    %s14 = scalar_lea.sflag [#allocation8], 1
    %15 = vsyncpa %s14, 0
    loop: start=0, step=1, limit=4
    $region2: #{tpu_custom_call.1} parent=1 // loop_pre_header
      _
    $region3: #{tpu_custom_call.1} parent=1 // loop_header
      %s17 = sphi 0, %s21
      %p18 = scmp.ge.s32.totalorder %s17, 4
      %s24 = sphi 0, %s43
      %s25 = sphi 0, %s39
      %s26 = sphi 0, %s35
      %s27 = sphi 0, %s24
      %s28 = sphi 0, %s25
      %s29 = sphi 0, %s26
      %s30 = sphi 0, %s27
      %s31 = sphi 0, %s28
      %s32 = sphi 0, %s29
      %s48 = sphi 0, %s50
      %s51 = sphi 0, %s48
      %s52 = sphi 0, %s51
      %s68 = sphi 0, %s52
      %s74 = sphi 0, %s76
      %s77 = sphi 0, %s74
      %s78 = sphi 0, %s77
      %s94 = sphi 0, %s78
      %s100 = sphi 0, %s102
      %s103 = sphi 0, %s100
      %s104 = sphi 0, %s103
      %s120 = sphi 0, %s104
    $region4: #{tpu_custom_call.1} parent=1 // loop_header_branch
      %20 = sbr.rel (%p18) target = $region8
    $region5: #{tpu_custom_call.1} parent=1 // loop_body
      %s22 = ssub.s32 %s17, 1
      %s23 = ssub.s32 %s17, 2
      %s33 = sadd.s32 1, %s26
      %p34 = scmp.ge.s32.totalorder %s33, 1
      %s35 = scalar_select %p34, 0, %s33
      %s36 = sadd.s32 1, %s25
      %s37 = scalar_select %p34, %s36, %s25
      %p38 = scmp.ge.s32.totalorder %s37, 1
      %s39 = scalar_select %p38, 0, %s37
      %s40 = sadd.s32 1, %s24
      %s41 = scalar_select %p38, %s40, %s24
      %p42 = scmp.ge.s32.totalorder %s41, 2
      %s43 = scalar_select %p42, 0, %s41
      %s44 = ssub.s32 %s24, %s43
      %s45 = ssub.s32 %s25, %s39
      %s46 = sor.u32 %s44, %s45
      %p47 = scmp.eq.s32.totalorder %s46, 0
      %s49 = sadd.s32 %s48, 1
      %s50 = scalar_select %p47, %s48, %s49
      %p53 = pneg %p47
      %p54 = scmp.eq.s32.totalorder %s17, 1
      %p55 = por %p53, %p54
      %p56 = scmp.ne.s32.totalorder %s48, %s51
      %p57 = scmp.eq.s32.totalorder %s17, 0
      %p58 = por %p56, %p57
      %p59 = scmp.ne.s32.totalorder %s48, %s51
      %p60 = scmp.eq.s32.totalorder %s22, 1
      %p61 = por %p59, %p60
      %p62 = scmp.ne.s32.totalorder %s51, %s52
      %p63 = scmp.eq.s32.totalorder %s22, 0
      %p64 = por %p62, %p63
      %p65 = scmp.ne.s32.totalorder %s51, %s52
      %p66 = scmp.eq.s32.totalorder %s23, 1
      %p67 = por %p65, %p66
      %p69 = scmp.ne.s32.totalorder %s52, %s68
      %p70 = scmp.eq.s32.totalorder %s23, 0
      %p71 = por %p69, %p70
      %s72 = ssub.s32 %s24, %s43
      %p73 = scmp.eq.s32.totalorder %s72, 0
      %s75 = sadd.s32 %s74, 1
      %s76 = scalar_select %p73, %s74, %s75
      %p79 = pneg %p73
      %p80 = scmp.eq.s32.totalorder %s17, 1
      %p81 = por %p79, %p80
      %p82 = scmp.ne.s32.totalorder %s74, %s77
      %p83 = scmp.eq.s32.totalorder %s17, 0
      %p84 = por %p82, %p83
      %p85 = scmp.ne.s32.totalorder %s74, %s77
      %p86 = scmp.eq.s32.totalorder %s22, 1
      %p87 = por %p85, %p86
      %p88 = scmp.ne.s32.totalorder %s77, %s78
      %p89 = scmp.eq.s32.totalorder %s22, 0
      %p90 = por %p88, %p89
      %p91 = scmp.ne.s32.totalorder %s77, %s78
      %p92 = scmp.eq.s32.totalorder %s23, 1
      %p93 = por %p91, %p92
      %p95 = scmp.ne.s32.totalorder %s78, %s94
      %p96 = scmp.eq.s32.totalorder %s23, 0
      %p97 = por %p95, %p96
      %s98 = ssub.s32 %s24, %s43
      %p99 = scmp.eq.s32.totalorder %s98, 0
      %s101 = sadd.s32 %s100, 1
      %s102 = scalar_select %p99, %s100, %s101
      %p105 = pneg %p99
      %p106 = scmp.eq.s32.totalorder %s17, 1
      %p107 = por %p105, %p106
      %p108 = scmp.ne.s32.totalorder %s100, %s103
      %p109 = scmp.eq.s32.totalorder %s17, 0
      %p110 = por %p108, %p109
      %p111 = scmp.ne.s32.totalorder %s100, %s103
      %p112 = scmp.eq.s32.totalorder %s22, 1
      %p113 = por %p111, %p112
      %p114 = scmp.ne.s32.totalorder %s103, %s104
      %p115 = scmp.eq.s32.totalorder %s22, 0
      %p116 = por %p114, %p115
      %p117 = scmp.ne.s32.totalorder %s103, %s104
      %p118 = scmp.eq.s32.totalorder %s23, 1
      %p119 = por %p117, %p118
      %p121 = scmp.ne.s32.totalorder %s104, %s120
      %p122 = scmp.eq.s32.totalorder %s23, 0
      %p123 = por %p121, %p122
      %p124 = scmp.le.s32.totalorder 1, %s17
      %p125 = scmp.lt.s32.totalorder %s17, 3
      %p126 = pnand %p124, %p125
      %p127 = pneg %p126
      // Predicated region
      $region9: #{tpu_custom_call.1} parent=5 // pred_check
        _
      $region10: #{tpu_custom_call.1} parent=5 // pred_check_branch
        %129 = sbr.rel (%p126) target = $region12
      $region11: #{tpu_custom_call.1} parent=5 // pred_region
        %s130 = ssub.s32 %s17, 1
      $region12: #{tpu_custom_call.1} parent=5 // pred_fallthru
        _
      %p131 = scmp.lt.s32.totalorder %s17, 2
      // Predicated region
      $region13: #{tpu_custom_call.1} parent=5 // pred_check
        %p132 = pneg %p131
      $region14: #{tpu_custom_call.1} parent=5 // pred_check_branch
        %134 = sbr.rel (%p132) target = $region16
      $region15: #{tpu_custom_call.1} parent=5 // pred_region
        // Predicated region
        $region17: #{tpu_custom_call.1} parent=15 // pred_check
          %p135 = pneg %p58
        $region18: #{tpu_custom_call.1} parent=15 // pred_check_branch
          %137 = sbr.rel (%p135) target = $region20
        $region19: #{tpu_custom_call.1} parent=15 // pred_region
          %s138 = sand.u32 %s48, 1
          %s139 = scalar_lea.sflag [#allocation7], %s138
          %s140 = sand.u32 %s48, 1
          %s141 = smul.addr %s140, 8
          %s142 = scalar_lea.vmem [#allocation6], %s141
          %144 = vsyncadd %s139, 0
          %s145 = sadd.s32 %s25, %s24
          %s146 = smul.addr %s145, 8
          %s147 = scalar_lea.hbm %s0, %s146
          %s149 = sshll.u32 %s147, 4
          %s150 = int_to_ptr.hbm [resolvable:$true] %s149
          %s151 = sshll.u32 %s142, 4
          %s152 = int_to_ptr.vmem [resolvable:$true] %s151
          %154 = dma.hbm_to_vmem [thread:$0]  %s150, 128, %s152, %s139
        $region20: #{tpu_custom_call.1} parent=15 // pred_fallthru
          _
        // Predicated region
        $region21: #{tpu_custom_call.1} parent=15 // pred_check
          %p155 = pneg %p84
        $region22: #{tpu_custom_call.1} parent=15 // pred_check_branch
          %157 = sbr.rel (%p155) target = $region24
        $region23: #{tpu_custom_call.1} parent=15 // pred_region
          %s158 = sand.u32 %s74, 1
          %s159 = scalar_lea.sflag [#allocation10], %s158
          %s160 = sand.u32 %s74, 1
          %s161 = smul.addr %s160, 8
          %s162 = scalar_lea.vmem [#allocation9], %s161
          %164 = vsyncadd %s159, 0
          %s165 = smul.addr %s24, 8
          %s166 = scalar_lea.hbm %s1, %s165
          %s168 = sshll.u32 %s166, 4
          %s169 = int_to_ptr.hbm [resolvable:$true] %s168
          %s170 = sshll.u32 %s162, 4
          %s171 = int_to_ptr.vmem [resolvable:$true] %s170
          %173 = dma.hbm_to_vmem [thread:$0]  %s169, 128, %s171, %s159
        $region24: #{tpu_custom_call.1} parent=15 // pred_fallthru
          _
      $region16: #{tpu_custom_call.1} parent=5 // pred_fallthru
        _
      %p174 = scmp.le.s32.totalorder 1, %s17
      %p175 = scmp.lt.s32.totalorder %s17, 3
      %p176 = pnand %p174, %p175
      %p177 = pneg %p176
      // Predicated region
      $region25: #{tpu_custom_call.1} parent=5 // pred_check
        _
      $region26: #{tpu_custom_call.1} parent=5 // pred_check_branch
        %179 = sbr.rel (%p176) target = $region28
      $region27: #{tpu_custom_call.1} parent=5 // pred_region
        %s180 = ssub.s32 %s17, 1
        %s181 = sand.u32 %s51, 1
        %s182 = scalar_lea.sflag [#allocation7], %s181
        %s183 = sand.u32 %s51, 1
        %s184 = smul.addr %s183, 8
        %s185 = scalar_lea.vmem [#allocation6], %s184
        // Predicated region
        $region29: #{tpu_custom_call.1} parent=27 // pred_check
          %p186 = pneg %p64
        $region30: #{tpu_custom_call.1} parent=27 // pred_check_branch
          %188 = sbr.rel (%p186) target = $region32
        $region31: #{tpu_custom_call.1} parent=27 // pred_region
          %190 = dma.done %s182, 128
        $region32: #{tpu_custom_call.1} parent=27 // pred_fallthru
          _
        %s191 = sand.u32 %s77, 1
        %s192 = scalar_lea.sflag [#allocation10], %s191
        %s193 = sand.u32 %s77, 1
        %s194 = smul.addr %s193, 8
        %s195 = scalar_lea.vmem [#allocation9], %s194
        // Predicated region
        $region33: #{tpu_custom_call.1} parent=27 // pred_check
          %p196 = pneg %p90
        $region34: #{tpu_custom_call.1} parent=27 // pred_check_branch
          %198 = sbr.rel (%p196) target = $region36
        $region35: #{tpu_custom_call.1} parent=27 // pred_region
          %200 = dma.done %s192, 128
        $region36: #{tpu_custom_call.1} parent=27 // pred_fallthru
          _
        %s201 = sand.u32 %s51, 1
        %s202 = scalar_lea.sflag [#allocation7], %s201
        %s203 = sand.u32 %s51, 1
        %s204 = smul.addr %s203, 8
        %s205 = scalar_lea.vmem [#allocation6], %s204
        %p206 = pneg %p64
        %p207 = pneg %p61
        %s208 = sand.u32 %s77, 1
        %s209 = scalar_lea.sflag [#allocation10], %s208
        %s210 = sand.u32 %s77, 1
        %s211 = smul.addr %s210, 8
        %s212 = scalar_lea.vmem [#allocation9], %s211
        %p213 = pneg %p90
        %p214 = pneg %p87
        %p215 = pneg %p116
        %p216 = pneg %p113
        %s217 = sand.u32 %s103, 1
        %s218 = scalar_lea.sflag [#allocation8], %s217
        %s219 = sand.u32 %s103, 1
        %s220 = smul.addr %s219, 8
        %s221 = scalar_lea.vmem [#allocation11], %s220
        %p223 = scmp.eq.s32.totalorder %s28, 0
        %p224 = scmp.eq.s32.totalorder %s29, 0
        %p225 = pnand %p223, %p224
        %p226 = pneg %p225
        // Predicated region
        $region37: #{tpu_custom_call.1} parent=27 // pred_check
          _
        $region38: #{tpu_custom_call.1} parent=27 // pred_check_branch
          %228 = sbr.rel (%p225) target = $region40
        $region39: #{tpu_custom_call.1} parent=27 // pred_region
          %229 = vst [vmem:[#allocation4] sm:$0x1] 0.0
          %230 = vst [vmem:[#allocation5] sm:$0x1] 0.0
          %v231 = vld [vmem:[%s195] sm:$0xff]
          %v232 = vrot.slane %v231, 4
          %v233 = vadd.f32 %v231, %v232
          %v234 = vrot.slane %v233, 2
          %v235 = vadd.f32 %v233, %v234
          %v236 = vrot.slane %v235, 1
          %v237 = vadd.f32 %v235, %v236
          %v238 = vrcp.pop 8.0
          %v239 = vmul.f32 8.0, %v238
          %v240 = vsub.f32 1.0, %v239
          %v241 = vmul.f32 %v238, %v240
          %v242 = vadd.f32 %v238, %v241
          %vm243 = vweird.f32 %v238
          %v244 = vsel %vm243, %v238, %v242
          %v245 = vmul.f32 %v237, %v244
          %v246 = vsub.f32 %v231, %v245
          %v247 = vmul.f32 %v246, %v246
          %v248 = vrot.slane %v247, 4
          %v249 = vadd.f32 %v247, %v248
          %v250 = vrot.slane %v249, 2
          %v251 = vadd.f32 %v249, %v250
          %v252 = vrot.slane %v251, 1
          %v253 = vadd.f32 %v251, %v252
          %v254 = vmul.f32 %v253, %v244
          %v255 = vadd.f32 %v254, 1e-05
          %v256 = vrsqrt.pop %v255
          %v257 = vmul.f32 %v256, %v255
          %v258 = vmul.f32 %v257, %v256
          %v259 = vmul.f32 0.5, %v258
          %v260 = vsub.f32 1.5, %v259
          %v261 = vmul.f32 %v256, %v260
          %vm262 = vweird.f32 %v255
          %vm263 = vweird.f32 %v256
          %vm264 = vmor %vm262, %vm263
          %v265 = vsel %vm264, %v256, %v261
          %v266 = vmul.f32 %v246, %v265
          %v267 = vpack.c.bf16 %v266, %v266
          %268 = vst [vmem:[#allocation3] sm:$0xf] %v267
        $region40: #{tpu_custom_call.1} parent=27 // pred_fallthru
          _
        // Predicated region
        $region41: #{tpu_custom_call.1} parent=27 // pred_check
          %p269 = pneg %p224
        $region42: #{tpu_custom_call.1} parent=27 // pred_check_branch
          %271 = sbr.rel (%p269) target = $region44
        $region43: #{tpu_custom_call.1} parent=27 // pred_region
          %v272 = vld [vmem:[%s185] sm:$0xff]
          %v273 = vrot.slane %v272, 4
          %v274 = vadd.f32 %v272, %v273
          %v275 = vrot.slane %v274, 2
          %v276 = vadd.f32 %v274, %v275
          %v277 = vrot.slane %v276, 1
          %v278 = vadd.f32 %v276, %v277
          %v279 = vrcp.pop 8.0
          %v280 = vmul.f32 8.0, %v279
          %v281 = vsub.f32 1.0, %v280
          %v282 = vmul.f32 %v279, %v281
          %v283 = vadd.f32 %v279, %v282
          %vm284 = vweird.f32 %v279
          %v285 = vsel %vm284, %v279, %v283
          %v286 = vmul.f32 %v278, %v285
          %v287 = vsub.f32 %v272, %v286
          %v288 = vmul.f32 %v287, %v287
          %v289 = vrot.slane %v288, 4
          %v290 = vadd.f32 %v288, %v289
          %v291 = vrot.slane %v290, 2
          %v292 = vadd.f32 %v290, %v291
          %v293 = vrot.slane %v292, 1
          %v294 = vadd.f32 %v292, %v293
          %v295 = vmul.f32 %v294, %v285
          %v296 = vadd.f32 %v295, 1e-05
          %v297 = vrsqrt.pop %v296
          %v298 = vmul.f32 %v297, %v296
          %v299 = vmul.f32 %v298, %v297
          %v300 = vmul.f32 0.5, %v299
          %v301 = vsub.f32 1.5, %v300
          %v302 = vmul.f32 %v297, %v301
          %vm303 = vweird.f32 %v296
          %vm304 = vweird.f32 %v297
          %vm305 = vmor %vm303, %vm304
          %v306 = vsel %vm305, %v297, %v302
          %v307 = vmul.f32 %v287, %v306
          %v308 = vmul.f32 %v307, 0.125
          %v309 = vpack.c.bf16 %v308, %v308
          %310 = vst [vmem:[#allocation2] sm:$0xf] %v309
        $region44: #{tpu_custom_call.1} parent=27 // pred_fallthru
          _
        %v311 = vld [vmem:[#allocation2] sm:$0xf]
        %s312 = smul.addr %s29, 4
        %s313 = scalar_lea.vmem [#allocation3], %s312
        %v314 = vld [vmem:[%s313] sm:$0xf]
        %315 = vxpose.xlu0.c.b16.start [1/8] %v311, 128
        %316 = vxpose.xlu0.c.b16.cont [2/8] 0, 128
        %317 = vxpose.xlu0.c.b16.cont [3/8] 0, 128
        %318 = vxpose.xlu0.c.b16.cont [4/8] 0, 128
        %319 = vxpose.xlu0.c.b16.cont [5/8] 0, 128
        %320 = vxpose.xlu0.c.b16.cont [6/8] 0, 128
        %321 = vxpose.xlu0.c.b16.cont [7/8] 0, 128
        %322 = vxpose.xlu0.c.b16.end [8/8] 0, 128
        %v323 = vpop.trf.xlu0
        %v324 = vpop.trf.xlu0
        %v325 = vpop.trf.xlu0
        %v326 = vpop.trf.xlu0
        %v327 = vpop.trf.xlu0
        %v328 = vpop.trf.xlu0
        %v329 = vpop.trf.xlu0
        %v330 = vpop.trf.xlu0
        %vm331 = vcmask 64512
        %v333 = vsel %vm331, %v323, 0
        %v336 = vsel %vm331, %v324, 0
        %v339 = vsel %vm331, %v325, 0
        %v342 = vsel %vm331, %v326, 0
        %v345 = vsel %vm331, %v327, 0
        %v348 = vsel %vm331, %v328, 0
        %v351 = vsel %vm331, %v329, 0
        %v354 = vsel %vm331, %v330, 0
        %vm356 = vcmask 1043456
        %v358 = vsel %vm356, %v314, 0
        %360 = vmatpush.bf16.msra.mxu0 0
        %361 = vmatpush.bf16.msra.mxu0 0
        %362 = vmatpush.bf16.msra.mxu0 0
        %363 = vmatpush.bf16.msra.mxu0 0
        %364 = vmatpush.bf16.msra.mxu0 0
        %365 = vmatpush.bf16.msra.mxu0 0
        %366 = vmatpush.bf16.msra.mxu0 0
        %367 = vmatpush.bf16.msra.mxu0 %v358
        %368 = vmatmul.bf16.gmra.mxu0 %v333
        %v369 = vpop.f32.mrf.mxu0
        %v370 = vadd.f32 0.0, %v369
        %v371 = vpop.f32.mrf.mxu0
        %v372 = vadd.f32 0.0, %v371
        %373 = vmatmul.bf16.gmra.mxu0 %v336
        %v374 = vpop.f32.mrf.mxu0
        %v375 = vadd.f32 0.0, %v374
        %v376 = vpop.f32.mrf.mxu0
        %v377 = vadd.f32 0.0, %v376
        %378 = vmatmul.bf16.gmra.mxu0 %v339
        %v379 = vpop.f32.mrf.mxu0
        %v380 = vadd.f32 0.0, %v379
        %v381 = vpop.f32.mrf.mxu0
        %v382 = vadd.f32 0.0, %v381
        %383 = vmatmul.bf16.gmra.mxu0 %v342
        %v384 = vpop.f32.mrf.mxu0
        %v385 = vadd.f32 0.0, %v384
        %v386 = vpop.f32.mrf.mxu0
        %v387 = vadd.f32 0.0, %v386
        %388 = vmatmul.bf16.gmra.mxu0 %v345
        %v389 = vpop.f32.mrf.mxu0
        %v390 = vadd.f32 0.0, %v389
        %v391 = vpop.f32.mrf.mxu0
        %v392 = vadd.f32 0.0, %v391
        %393 = vmatmul.bf16.gmra.mxu0 %v348
        %v394 = vpop.f32.mrf.mxu0
        %v395 = vadd.f32 0.0, %v394
        %v396 = vpop.f32.mrf.mxu0
        %v397 = vadd.f32 0.0, %v396
        %398 = vmatmul.bf16.gmra.mxu0 %v351
        %v399 = vpop.f32.mrf.mxu0
        %v400 = vadd.f32 0.0, %v399
        %v401 = vpop.f32.mrf.mxu0
        %v402 = vadd.f32 0.0, %v401
        %403 = vmatmul.bf16.gmra.mxu0 %v354
        %v404 = vpop.f32.mrf.mxu0
        %v405 = vadd.f32 0.0, %v404
        %v406 = vpop.f32.mrf.mxu0
        %v407 = vadd.f32 0.0, %v406
        %408 = vdwg.mxu0
        %v409 = vmul.f32 %v370, %v370
        %v410 = vmul.f32 %v372, %v372
        %v411 = vmul.f32 %v375, %v375
        %v412 = vmul.f32 %v377, %v377
        %v413 = vmul.f32 %v380, %v380
        %v414 = vmul.f32 %v382, %v382
        %v415 = vmul.f32 %v385, %v385
        %v416 = vmul.f32 %v387, %v387
        %v417 = vmul.f32 %v390, %v390
        %v418 = vmul.f32 %v392, %v392
        %v419 = vmul.f32 %v395, %v395
        %v420 = vmul.f32 %v397, %v397
        %v421 = vmul.f32 %v400, %v400
        %v422 = vmul.f32 %v402, %v402
        %v423 = vmul.f32 %v405, %v405
        %v424 = vmul.f32 %v407, %v407
        %v425 = vld [vmem:[#allocation4] sm:$0x1]
        %v426 = vadd.f32 %v409, %v410
        %v427 = vadd.f32 %v426, %v411
        %v428 = vadd.f32 %v427, %v412
        %v429 = vadd.f32 %v428, %v413
        %v430 = vadd.f32 %v429, %v414
        %v431 = vadd.f32 %v430, %v415
        %v432 = vadd.f32 %v431, %v416
        %v433 = vadd.f32 %v432, %v417
        %v434 = vadd.f32 %v433, %v418
        %v435 = vadd.f32 %v434, %v419
        %v436 = vadd.f32 %v435, %v420
        %v437 = vadd.f32 %v436, %v421
        %v438 = vadd.f32 %v437, %v422
        %v439 = vadd.f32 %v438, %v423
        %v440 = vadd.f32 %v439, %v424
        %v441 = vrot.slane %v440, 4
        %v442 = vadd.f32 %v440, %v441
        %v443 = vrot.slane %v442, 2
        %v444 = vadd.f32 %v442, %v443
        %v445 = vrot.slane %v444, 1
        %v446 = vadd.f32 %v444, %v445
        %v447 = vadd.f32 %v425, %v446
        %448 = vst [vmem:[#allocation4] sm:$0x1] %v447
        %p449 = scmp.eq.s32.totalorder %s28, %s29
        // Predicated region
        $region45: #{tpu_custom_call.1} parent=27 // pred_check
          %p450 = pneg %p449
        $region46: #{tpu_custom_call.1} parent=27 // pred_check_branch
          %452 = sbr.rel (%p450) target = $region48
        $region47: #{tpu_custom_call.1} parent=27 // pred_region
          %v453 = vunpack.c.l.bf16 %v311
          %v454 = vunpack.c.l.bf16 %v314
          %v455 = vmul.f32 %v453, %v454
          %v456 = vrot.slane %v455, 4
          %v457 = vadd.f32 %v455, %v456
          %v458 = vrot.slane %v457, 2
          %v459 = vadd.f32 %v457, %v458
          %v460 = vrot.slane %v459, 1
          %v461 = vadd.f32 %v459, %v460
          %v462 = vsub.f32 %v461, 1.0
          %v463 = vmul.f32 %v462, %v462
          %v464 = vmul.f32 %v461, %v461
          %v465 = vld [vmem:[#allocation5] sm:$0x1]
          %v466 = vmul.f32 %v464, 0.0078125
          %v467 = vsub.f32 %v463, %v466
          %v468 = vadd.f32 %v465, %v467
          %469 = vst [vmem:[#allocation5] sm:$0x1] %v468
        $region48: #{tpu_custom_call.1} parent=27 // pred_fallthru
          _
        // Predicated region
        $region49: #{tpu_custom_call.1} parent=27 // pred_check
          _
        $region50: #{tpu_custom_call.1} parent=27 // pred_check_branch
          %471 = sbr.rel (%p225) target = $region52
        $region51: #{tpu_custom_call.1} parent=27 // pred_region
          %v472 = vld [vmem:[#allocation4] sm:$0x1]
          %vm473 = vcmask 1040384
          %v474 = vsel %vm473, %v472, 0.0
          %475 = vadd.xlane.f32.xlu0 %v474
          %v476 = vpop.xlane.xlu0 %475
          %v477 = vrot.slane %v476, 4
          %v478 = vadd.f32 %v476, %v477
          %v479 = vrot.slane %v478, 2
          %v480 = vadd.f32 %v478, %v479
          %v481 = vrot.slane %v480, 1
          %v482 = vadd.f32 %v480, %v481
          %s483 = vtos %v482
          %s484 = smul.f32 %s483, 0.0078125
          %v485 = vld [vmem:[#allocation5] sm:$0x1]
          %v486 = vsel %vm473, %v485, 0.0
          %487 = vadd.xlane.f32.xlu0 %v486
          %v488 = vpop.xlane.xlu0 %487
          %v489 = vrot.slane %v488, 4
          %v490 = vadd.f32 %v488, %v489
          %v491 = vrot.slane %v490, 2
          %v492 = vadd.f32 %v490, %v491
          %v493 = vrot.slane %v492, 1
          %v494 = vadd.f32 %v492, %v493
          %s495 = vtos %v494
          %s496 = sadd.f32 %s484, %s495
          %v497 = vstv %s496
          %498 = vst [vmem:[%s221] sm:$0xff] %v497
        $region52: #{tpu_custom_call.1} parent=27 // pred_fallthru
          _
        %s499 = sand.u32 %s103, 1
        %s500 = scalar_lea.sflag [#allocation8], %s499
        %s501 = sand.u32 %s103, 1
        %s502 = smul.addr %s501, 8
        %s503 = scalar_lea.vmem [#allocation11], %s502
        // Predicated region
        $region53: #{tpu_custom_call.1} parent=27 // pred_check
          %p504 = pneg %p113
        $region54: #{tpu_custom_call.1} parent=27 // pred_check_branch
          %506 = sbr.rel (%p504) target = $region56
        $region55: #{tpu_custom_call.1} parent=27 // pred_region
          %508 = vsyncadd %s500, 0
          %s509 = smul.addr %s27, 8
          %s510 = scalar_lea.hbm %s2, %s509
          %s512 = sshll.u32 %s503, 4
          %s513 = int_to_ptr.vmem [resolvable:$true] %s512
          %s514 = sshll.u32 %s510, 4
          %s515 = int_to_ptr.hbm [resolvable:$true] %s514
          %517 = dma.vmem_to_hbm [thread:$0]  %s513, 128, %s515, %s500
        $region56: #{tpu_custom_call.1} parent=27 // pred_fallthru
          _
      $region28: #{tpu_custom_call.1} parent=5 // pred_fallthru
        _
      %p518 = scmp.le.s32.totalorder 2, %s17
      // Predicated region
      $region57: #{tpu_custom_call.1} parent=5 // pred_check
        %p519 = pneg %p518
      $region58: #{tpu_custom_call.1} parent=5 // pred_check_branch
        %521 = sbr.rel (%p519) target = $region60
      $region59: #{tpu_custom_call.1} parent=5 // pred_region
        %s522 = ssub.s32 %s17, 2
        // Predicated region
        $region61: #{tpu_custom_call.1} parent=59 // pred_check
          %p523 = pneg %p119
        $region62: #{tpu_custom_call.1} parent=59 // pred_check_branch
          %525 = sbr.rel (%p523) target = $region64
        $region63: #{tpu_custom_call.1} parent=59 // pred_region
          %s526 = sand.u32 %s104, 1
          %s527 = scalar_lea.sflag [#allocation8], %s526
          %s528 = sand.u32 %s104, 1
          %s529 = smul.addr %s528, 8
          %s530 = scalar_lea.vmem [#allocation11], %s529
          %532 = dma.done %s527, 128
        $region64: #{tpu_custom_call.1} parent=59 // pred_fallthru
          _
      $region60: #{tpu_custom_call.1} parent=5 // pred_fallthru
        _
    $region6: #{tpu_custom_call.1} parent=1 // loop_footer
      %s21 = sadd.s32 1, %s17
    $region7: #{tpu_custom_call.1} parent=1 // loop_footer_branch
      %16 = sbr.rel target = $region3
    $region8: #{tpu_custom_call.1} parent=1 // loop_exit
      _
    %533 = vsyncpa [#allocation7], 1
    %s534 = scalar_lea.sflag [#allocation7], 1
    %535 = vsyncpa %s534, 1
    %536 = vsyncpa [#allocation10], 1
    %s537 = scalar_lea.sflag [#allocation10], 1
    %538 = vsyncpa %s537, 1
    %539 = vsyncpa [#allocation8], 1
    %s540 = scalar_lea.sflag [#allocation8], 1
    %541 = vsyncpa %s540, 1

</llo_original>
